<compile_context>
chip_gen: v7x
topology: tpu7x:2x2x1
jax: 0.10.0
libtpu: 0.0.40
codegen_flags: <defaults>
</compile_context>

<pallas_src>
import functools

import jax
import jax.numpy as jnp
from jax.experimental import pallas as pl
from jax.experimental.pallas import tpu as pltpu

EPS = 1e-5
LANE = 128


# ------------------------------ small helpers ------------------------------ #

def _round_up(c, m=LANE):
    return ((c + m - 1) // m) * m


def _tpu_flavor():
    """Generation-aware tile/VMEM budget (v7x: 64 MiB VMEM + 2 TCs; v5e/v6e: 128 MiB, 1 TC)."""
    try:
        kind = jax.devices()[0].device_kind.lower()
    except Exception:  # pragma: no cover - defensive only
        kind = ""
    if "v7" in kind or "tpu7" in kind:
        return dict(two_tc=True, vmem_budget=28 << 20, vmem_limit=44 << 20)
    return dict(two_tc=False, vmem_budget=72 << 20, vmem_limit=100 << 20)


# ----------------------------- 1x1 conv kernels ----------------------------- #

def _mm_bias_kernel(x_ref, w_ref, b_ref, o_ref, *, relu):
    # y = x @ w + b ; optional ReLU.  (1x1 conv with BN scale pre-folded into w)
    y = jnp.dot(x_ref[...], w_ref[...], preferred_element_type=jnp.float32) + b_ref[...]
    if relu:
        y = jnp.maximum(y, 0.0)
    o_ref[...] = y.astype(o_ref.dtype)


def _mm_bias_add_relu_kernel(x_ref, w_ref, b_ref, res_ref, o_ref):
    # Final 1x1 conv fused with identity-shortcut add + ReLU.
    y = jnp.dot(x_ref[...], w_ref[...], preferred_element_type=jnp.float32)
    y = y + b_ref[...] + res_ref[...].astype(jnp.float32)
    o_ref[...] = jnp.maximum(y, 0.0).astype(o_ref.dtype)


def _mm_bias_proj_add_relu_kernel(x_ref, w_ref, b_ref, xs_ref, wp_ref, bp_ref, o_ref):
    # Final 1x1 conv fused with the projection-shortcut matmul + add + ReLU.
    y = jnp.dot(x_ref[...], w_ref[...], preferred_element_type=jnp.float32)
    sc = jnp.dot(xs_ref[...], wp_ref[...], preferred_element_type=jnp.float32)
    y = y + b_ref[...] + sc + bp_ref[...]
    o_ref[...] = jnp.maximum(y, 0.0).astype(o_ref.dtype)


def _mm_vmem_bytes(tm, tn, K, Kp, has_res, out_bytes):
    b = 2 * (tm * K * 2 + K * tn * 2 + tn * 4)            # x, w, bias (double-buffered)
    if Kp:
        b += 2 * (tm * Kp * 2 + Kp * tn * 2 + tn * 4)      # projection operands
    if has_res:
        b += 2 * (tm * tn * 2)                             # residual tile
    b += 2 * (tm * tn * out_bytes)                         # output tile
    return b


def _pick_mm_tiles(M, K, N, flavor, *, Kp=0, has_res=False, out_bytes=4):
    # N tile: lane-dense multiple of 128, <= 512.
    tn = N
    for cand in range(min(N, 512), 0, -LANE):
        if N % cand == 0:
            tn = cand
            break
    # M tile: largest tile that fits the per-generation VMEM budget; on 2-TC parts cap
    # at 256 and prefer >=2 total grid steps (megacore), on 1-TC parts go up to 1024.
    cap = 256 if flavor["two_tc"] else 1024
    cands = sorted((t for t in range(8, min(M, cap) + 1, 8) if M % t == 0), reverse=True)
    if not cands:
        cands = [M]
    fitting = [t for t in cands
               if _mm_vmem_bytes(t, tn, K, Kp, has_res, out_bytes) <= flavor["vmem_budget"]]
    if not fitting:
        fitting = [cands[-1]]
    if flavor["two_tc"]:
        multi = [t for t in fitting if (M // t) * (N // tn) >= 2]
        if multi:
            return multi[0], tn
    return fitting[0], tn


def matmul_bias(x2d, w2d, bias, *, out_dtype, relu=True, residual=None, proj=None):
    """y = act(x2d @ w2d + bias [+ residual | + (xs @ wp + bp)]), (M, N)-tiled.

    Matmul operands are bf16; bias is f32 shaped (1, N).  The fused residual /
    projection variants always end with ReLU (that is what the block computes).
    """
    M, K = x2d.shape
    Kw, N = w2d.shape
    assert K == Kw and M % 8 == 0, (M, K)   # TODO(synk): pad rows for arbitrary M
    flavor = _tpu_flavor()
    Kp = proj[0].shape[1] if proj is not None else 0
    tm, tn = _pick_mm_tiles(M, K, N, flavor, Kp=Kp, has_res=residual is not None,
                            out_bytes=jnp.dtype(out_dtype).itemsize)

    in_specs = [
        pl.BlockSpec((tm, K), lambda i, j: (i, 0)),
        pl.BlockSpec((K, tn), lambda i, j: (0, j)),
        pl.BlockSpec((1, tn), lambda i, j: (0, j)),
    ]
    args = [x2d, w2d, bias]

    if proj is not None:
        assert relu
        xs2d, wp2d, bp = proj
        assert xs2d.shape[0] == M
        kernel = _mm_bias_proj_add_relu_kernel
        in_specs += [
            pl.BlockSpec((tm, Kp), lambda i, j: (i, 0)),
            pl.BlockSpec((Kp, tn), lambda i, j: (0, j)),
            pl.BlockSpec((1, tn), lambda i, j: (0, j)),
        ]
        args += [xs2d, wp2d, bp]
    elif residual is not None:
        assert relu and residual.shape == (M, N)
        kernel = _mm_bias_add_relu_kernel
        in_specs.append(pl.BlockSpec((tm, tn), lambda i, j: (i, j)))
        args.append(residual)
    else:
        kernel = functools.partial(_mm_bias_kernel, relu=relu)

    return pl.pallas_call(
        kernel,
        out_shape=jax.ShapeDtypeStruct((M, N), out_dtype),
        grid=(M // tm, N // tn),
        in_specs=in_specs,
        out_specs=pl.BlockSpec((tm, tn), lambda i, j: (i, j)),
        compiler_params=pltpu.CompilerParams(
            dimension_semantics=("parallel", "parallel"),
            vmem_limit_bytes=flavor["vmem_limit"]),
    )(*args)


# ----------------------------- 3x3 conv kernel ------------------------------ #

def _conv3x3_kernel(*refs, n_phases, taps, rows, halo):
    """9-tap 3x3 conv on flattened phase rows.

    refs = [main_0, halo_0, ..., main_{p-1}, halo_{p-1}, w, b, out, stage, acc].
    Each tap is a contiguous 2-D bf16 slice of `stage` (no casts / reshapes) feeding a
    bf16 MXU dot, accumulated into an explicit f32 VMEM scratch (`acc`).
    """
    w_ref = refs[2 * n_phases]
    b_ref = refs[2 * n_phases + 1]
    o_ref = refs[2 * n_phases + 2]
    stage = refs[2 * n_phases + 3]
    acc = refs[2 * n_phases + 4]

    first = True
    for p in range(n_phases):
        # Stage this phase's main tile + halo contiguously in VMEM.
        stage[0:rows, :] = refs[2 * p][0]
        stage[rows:rows + halo, :] = refs[2 * p + 1][0]
        for p_idx, w_idx, shift in taps:
            if p_idx != p:
                continue
            contrib = jnp.dot(stage[shift:shift + rows, :], w_ref[w_idx],
                              preferred_element_type=jnp.float32)
            if first:
                acc[...] = contrib            # init with the first tap (no zero-fill)
                first = False
            else:
                acc[...] += contrib
    y = jnp.maximum(acc[...] + b_ref[...], 0.0)
    o_ref[0] = y.astype(o_ref.dtype)


def _conv_vmem_bytes(n_ph, rows, hb, C, Cout, out_bytes=2):
    b = 2 * n_ph * ((rows + hb) * C * 2)           # phase main + halo (double-buffered)
    b += 2 * (9 * C * Cout * 2 + Cout * 4)          # weights + bias
    b += 2 * rows * Cout * out_bytes                # output tile
    b += (rows + hb) * C * 2 + rows * Cout * 4      # stage + acc scratch
    return b


def _pick_conv_tile(Ho, Wg, k, n_ph, C, Cout, batch, flavor):
    """Pick (output rows per step, halo rows in flat units), VMEM-budgeted & aligned."""
    shift_max = k * Wg + k
    cands = [t for t in range(Ho, 0, -1)
             if Ho % t == 0 and (t * Wg) % 8 == 0 and t >= k + 1]
    # TODO(synk): tiny/odd feature maps (e.g. 7x7 stride-1) need output-row padding.
    assert cands, ("feature map unsupported by this 3x3 tiling", Ho, Wg)
    fitting = []
    for t in cands:                                   # largest tile first
        rows = t * Wg
        hb = next(h for h in range(8, rows + 1, 8) if rows % h == 0 and h >= shift_max)
        if _conv_vmem_bytes(n_ph, rows, hb, C, Cout) <= flavor["vmem_budget"]:
            fitting.append((t, hb))
    if not fitting:
        t = cands[-1]
        rows = t * Wg
        hb = next(h for h in range(8, rows + 1, 8) if rows % h == 0 and h >= shift_max)
        fitting = [(t, hb)]
    if flavor["two_tc"]:
        multi = [th for th in fitting if batch * (Ho // th[0]) >= 2]
        if multi:
            return multi[0]
    return fitting[0]


def conv3x3_bn_relu(x_nhwc, w9, bias, stride, *, out_dtype=jnp.bfloat16):
    """3x3 conv (pad=1, stride) + folded-BN bias + ReLU, without im2col.

    x_nhwc: (N, H, W, C) bf16, channels already lane-padded.
    w9:     (9, C, Cout) bf16 (BN scale folded), tap order (dy, dx).
    bias:   (1, Cout) f32.
    """
    N, H, W, C = x_nhwc.shape
    Cout = w9.shape[-1]
    s = stride
    assert s in (1, 2)
    if s == 2:
        # TODO(synk): odd spatial dims need per-phase shape handling.
        assert H % 2 == 0 and W % 2 == 0, (H, W)
    Ho, Wo = (H - 1) // s + 1, (W - 1) // s + 1
    k = 2 // s                      # max tap offset (in phase rows / cols)

    xp = jnp.pad(x_nhwc, ((0, 0), (1, 1), (1, 1), (0, 0)))
    if s == 1:
        phases = [xp]               # stride 1: no phase copies, just the spatial pad
    else:
        # TODO(synk): phase-split copies ~1x extra activation HBM traffic; a manual
        # strided-DMA variant (memory_space=pl.ANY) would remove it.
        phases = [xp[:, py::2, px::2, :] for py in range(2) for px in range(2)]
    Hp, Wg = phases[0].shape[1], phases[0].shape[2]
    assert Hp == Ho + k and Wg == Wo + k, (Hp, Wg, Ho, Wo, k)

    flavor = _tpu_flavor()
    tr, hb = _pick_conv_tile(Ho, Wg, k, len(phases), C, Cout, N, flavor)
    rows = tr * Wg
    T = Ho // tr

    # Flatten each phase to 2-D rows (free, row-major) and pad so the last row-tile's
    # halo block stays in bounds.  Taps become pure shifts on the flat rows.
    L = Ho * Wg + hb
    flat = [jnp.pad(p.reshape(N, Hp * Wg, C), ((0, 0), (0, L - Hp * Wg), (0, 0)))
            for p in phases]

    ratio = rows // hb
    in_specs = []
    phase_args = []
    for p in flat:
        in_specs.append(pl.BlockSpec((1, rows, C), lambda n, i: (n, i, 0)))
        in_specs.append(pl.BlockSpec((1, hb, C),
                                     lambda n, i, r=ratio: (n, (i + 1) * r, 0)))
        phase_args += [p, p]        # same array, main-tile view + halo view
    in_specs += [pl.BlockSpec((9, C, Cout), lambda n, i: (0, 0, 0)),
                 pl.BlockSpec((1, Cout), lambda n, i: (0, 0))]

    taps = tuple(((dy % s) * s + (dx % s) if s == 2 else 0,   # phase index
                  dy * 3 + dx,                                # weight slab index
                  (dy // s) * Wg + (dx // s))                 # flat-row shift
                 for dy in range(3) for dx in range(3))

    kernel = functools.partial(_conv3x3_kernel, n_phases=len(phases), taps=taps,
                               rows=rows, halo=hb)
    out = pl.pallas_call(
        kernel,
        out_shape=jax.ShapeDtypeStruct((N, Ho * Wg, Cout), out_dtype),
        grid=(N, T),
        in_specs=in_specs,
        out_specs=pl.BlockSpec((1, rows, Cout), lambda n, i: (n, i, 0)),
        scratch_shapes=[pltpu.VMEM((rows + hb, C), jnp.bfloat16),
                        pltpu.VMEM((rows, Cout), jnp.float32)],
        compiler_params=pltpu.CompilerParams(
            dimension_semantics=("parallel", "parallel"),
            vmem_limit_bytes=flavor["vmem_limit"]),
    )(*phase_args, w9, bias)

    # Drop the k garbage columns the flattened-row formulation produces per output row.
    return out.reshape(N, Ho, Wg, Cout)[:, :, :Wo, :]


# --------------------------- BN folding / weights --------------------------- #

def fold_bn(p):
    """Fold conv bias + eval-mode BatchNorm into per-channel (scale, bias)."""
    s = p["gamma"] * jax.lax.rsqrt(p["var"] + EPS)
    b = (p["b"] - p["mean"]) * s + p["beta"]
    return s, b


def conv1x1_weights(p, cin_pad, cout_pad):
    s, b = fold_bn(p)
    cout, cin = p["w"].shape[:2]
    w2d = p["w"].reshape(cout, cin).T * s[None, :]
    w2d = jnp.pad(w2d, ((0, cin_pad - cin), (0, cout_pad - cout)))
    bias = jnp.pad(b, (0, cout_pad - cout)).reshape(1, cout_pad)
    return w2d.astype(jnp.bfloat16), bias.astype(jnp.float32)


def conv3x3_weights(p, cin_pad, cout_pad):
    s, b = fold_bn(p)
    cout, cin = p["w"].shape[:2]
    w9 = jnp.transpose(p["w"], (2, 3, 1, 0)).reshape(9, cin, cout) * s[None, None, :]
    w9 = jnp.pad(w9, ((0, 0), (0, cin_pad - cin), (0, cout_pad - cout)))
    bias = jnp.pad(b, (0, cout_pad - cout)).reshape(1, cout_pad)
    return w9.astype(jnp.bfloat16), bias.astype(jnp.float32)


# --------------------------- parameter construction ------------------------- #

def init_conv_bn(key, cin, cout, k):
    k1, k2, k3, k4, k5, k6 = jax.random.split(key, 6)
    return dict(
        w=0.1 * jax.random.normal(k1, (cout, cin, k, k), jnp.float32),
        b=0.05 * jax.random.normal(k2, (cout,), jnp.float32),
        gamma=1.0 + 0.1 * jax.random.normal(k3, (cout,), jnp.float32),
        beta=0.1 * jax.random.normal(k4, (cout,), jnp.float32),
        mean=0.1 * jax.random.normal(k5, (cout,), jnp.float32),
        var=jax.random.uniform(k6, (cout,), jnp.float32, minval=0.5, maxval=1.5),
    )


def init_residual_block(key, in_channels, out_channels, first=False):
    projection = in_channels != out_channels
    stride, res_channels, p_stride = 1, in_channels // 4, 1
    if projection:
        stride, res_channels, p_stride = 2, in_channels // 2, 2
    if first:
        stride, res_channels, p_stride = 1, in_channels, 1
    k0, k1, k2, k3 = jax.random.split(key, 4)
    params = {
        "cfg": dict(projection=projection, stride=stride,
                    res_channels=res_channels, p_stride=p_stride),
        "c1": init_conv_bn(k1, in_channels, res_channels, 1),
        "c2": init_conv_bn(k2, res_channels, res_channels, 3),
        "c3": init_conv_bn(k3, res_channels, out_channels, 1),
    }
    if projection:
        # NB: the PyTorch module also builds an (unused) `p` when first=True and
        # in==out; forward never applies it, so it is skipped here.
        params["p"] = init_conv_bn(k0, in_channels, out_channels, 1)
    return params


# ------------------------------- forward ----------------------------------- #

def residual_block_forward(x_nchw, params, *, out_dtype=jnp.float32):
    """ResidualBlock forward.  For stacked blocks pass out_dtype=bf16 and keep the
    activations in padded NHWC between blocks (halves writeback traffic)."""
    cfg = params["cfg"]
    proj, stride, cm, ps = (cfg["projection"], cfg["stride"],
                            cfg["res_channels"], cfg["p_stride"])
    x = jnp.transpose(x_nchw, (0, 2, 3, 1))                     # NHWC, f32
    N, H, W, Cin = x.shape
    Cout = params["c3"]["w"].shape[0]
    cin_p, cm_p, cout_p = _round_up(Cin), _round_up(cm), _round_up(Cout)
    # TODO(synk): channel counts << 128 are mostly lane-padding overhead; this kernel is
    # only efficient at C >= 128 (fold spatial into lanes / batch blocks otherwise).

    # Lane-pad channels once; bf16 activations for all MXU operands.
    xpc = jnp.pad(x, ((0, 0), (0, 0), (0, 0), (0, cin_p - Cin))).astype(jnp.bfloat16)
    x2d = xpc.reshape(N * H * W, cin_p)

    # ---- c1: 1x1 conv + BN + ReLU (tiled matmul, bf16 out) ----
    w1, b1 = conv1x1_weights(params["c1"], cin_p, cm_p)
    f = matmul_bias(x2d, w1, b1, relu=True, out_dtype=jnp.bfloat16)
    f = f.reshape(N, H, W, cm_p)

    # ---- c2: 3x3 conv (pad=1, stride) + BN + ReLU, no im2col ----
    w2, b2 = conv3x3_weights(params["c2"], cm_p, cm_p)
    f = conv3x3_bn_relu(f, w2, b2, stride, out_dtype=jnp.bfloat16)
    _, Ho, Wo, _ = f.shape
    f2d = f.reshape(N * Ho * Wo, cm_p)

    # ---- c3: 1x1 conv + BN, fused with shortcut (+projection) + add + ReLU ----
    w3, b3 = conv1x1_weights(params["c3"], cm_p, cout_p)
    if proj:
        wp, bp = conv1x1_weights(params["p"], cin_p, cout_p)
        xs2d = xpc[:, ::ps, ::ps, :].reshape(N * Ho * Wo, cin_p)
        out2d = matmul_bias(f2d, w3, b3, out_dtype=out_dtype, proj=(xs2d, wp, bp))
    else:
        # Identity shortcut is only valid when spatial size and channels are preserved.
        assert stride == 1 and Cin == Cout and cin_p == cout_p, (stride, Cin, Cout)
        out2d = matmul_bias(f2d, w3, b3, out_dtype=out_dtype, residual=x2d)

    out = out2d.reshape(N, Ho, Wo, cout_p)[..., :Cout]
    return jnp.transpose(out, (0, 3, 1, 2))                     # back to NCHW


# --------------------------- pure-JAX reference ----------------------------- #

def _conv_bn_ref(x_nhwc, p, stride, pad, relu):
    w = jnp.transpose(p["w"], (2, 3, 1, 0))                     # HWIO
    y = jax.lax.conv_general_dilated(
        x_nhwc, w, (stride, stride), [(pad, pad), (pad, pad)],
        dimension_numbers=("NHWC", "HWIO", "NHWC"))
    y = y + p["b"]
    s = p["gamma"] / jnp.sqrt(p["var"] + EPS)
    y = (y - p["mean"]) * s + p["beta"]
    return jnp.maximum(y, 0.0) if relu else y


def residual_block_ref(x_nchw, params):
    cfg = params["cfg"]
    x = jnp.transpose(x_nchw, (0, 2, 3, 1)).astype(jnp.float32)
    f = _conv_bn_ref(x, params["c1"], 1, 0, relu=True)
    f = _conv_bn_ref(f, params["c2"], cfg["stride"], 1, relu=True)
    f = _conv_bn_ref(f, params["c3"], 1, 0, relu=False)
    sc = _conv_bn_ref(x, params["p"], cfg["p_stride"], 0, relu=False) if cfg["projection"] else x
    h = jnp.maximum(f + sc, 0.0)
    return jnp.transpose(h, (0, 3, 1, 2))


# --------------------------------- main ------------------------------------ #

if __name__ == "__main__":
    # Config A: projection block (in != out -> stride 2, res = in // 2).
    in_channels, out_channels = 8, 16
    N, H, W = 2, 16, 16
    params = init_residual_block(jax.random.PRNGKey(0), in_channels, out_channels,
                                 first=False)
    x = jax.random.normal(jax.random.PRNGKey(1), (N, in_channels, H, W), jnp.float32)

    y = residual_block_forward(x, params)
    jax.block_until_ready(y)
    assert y.shape == (N, out_channels, H // 2, W // 2), y.shape
    y_ref = residual_block_ref(x, params)
    err_a = float(jnp.max(jnp.abs(y - y_ref)))
    assert jnp.allclose(y, y_ref, atol=2e-2, rtol=2e-2), err_a

    # Config B: identity-shortcut block (in == out -> stride 1, res = in // 4).
    params_b = init_residual_block(jax.random.PRNGKey(2), 16, 16, first=False)
    xb = jax.random.normal(jax.random.PRNGKey(3), (2, 16, 8, 8), jnp.float32)
    yb = residual_block_forward(xb, params_b)
    jax.block_until_ready(yb)
    assert yb.shape == (2, 16, 8, 8), yb.shape
    yb_ref = residual_block_ref(xb, params_b)
    err_b = float(jnp.max(jnp.abs(yb - yb_ref)))
    assert jnp.allclose(yb, yb_ref, atol=2e-2, rtol=2e-2), err_b

    print("KERNEL_OK")
</pallas_src>

<mosaic_0001>
module attributes {stable_mosaic.version = 11 : i64} {
  func.func @_mm_bias_kernel(%arg0: i32, %arg1: i32, %arg2: memref<512x128xbf16, #tpu.memory_space<vmem>>, %arg3: memref<128x128xbf16, #tpu.memory_space<vmem>>, %arg4: memref<1x128xf32, #tpu.memory_space<vmem>>, %arg5: memref<512x128xbf16, #tpu.memory_space<vmem>>) attributes {dimension_semantics = [#tpu.dimension_semantics<parallel>, #tpu.dimension_semantics<parallel>], iteration_bounds = array<i64: 1, 1>, scalar_prefetch = 0 : i64, scratch_operands = 0 : i64, tpu.core_type = #tpu.core_type<tc>, window_params = [{transform_indices = @transform_0, window_bounds = array<i64: 512, 128>}, {transform_indices = @transform_1, window_bounds = array<i64: 128, 128>}, {transform_indices = @transform_2, window_bounds = array<i64: 1, 128>}, {transform_indices = @transform_3, window_bounds = array<i64: 512, 128>}]} {
    %c0 = arith.constant 0 : index
    %c0_0 = arith.constant 0 : index
    %0 = vector.load %arg2[%c0, %c0_0] : memref<512x128xbf16, #tpu.memory_space<vmem>>, vector<512x128xbf16>
    %c0_1 = arith.constant 0 : index
    %c0_2 = arith.constant 0 : index
    %1 = vector.load %arg3[%c0_1, %c0_2] : memref<128x128xbf16, #tpu.memory_space<vmem>>, vector<128x128xbf16>
    %cst = arith.constant dense<0.000000e+00> : vector<512x128xf32>
    %2 = tpu.matmul %0, %1, %cst {dimension_numbers = #tpu.dot_dimension_numbers<[1], [0], [0], [1], [0, 0, 1, 1], [], []>} : vector<512x128xbf16>, vector<128x128xbf16>, vector<512x128xf32> -> vector<512x128xf32>
    %c0_3 = arith.constant 0 : index
    %c0_4 = arith.constant 0 : index
    %3 = vector.load %arg4[%c0_3, %c0_4] : memref<1x128xf32, #tpu.memory_space<vmem>>, vector<1x128xf32>
    %4 = vector.broadcast %3 : vector<1x128xf32> to vector<512x128xf32>
    %5 = arith.addf %2, %4 : vector<512x128xf32>
    %cst_5 = arith.constant 0.000000e+00 : f32
    %6 = vector.broadcast %cst_5 : f32 to vector<512x128xf32>
    %7 = arith.maximumf %5, %6 : vector<512x128xf32>
    %8 = arith.truncf %7 : vector<512x128xf32> to vector<512x128xbf16>
    %c0_6 = arith.constant 0 : index
    %c0_7 = arith.constant 0 : index
    %9 = vector.load %arg5[%c0_6, %c0_7] : memref<512x128xbf16, #tpu.memory_space<vmem>>, vector<512x128xbf16>
    tpu.vector_store %arg5[%c0_6, %c0_7], %8 {strides = array<i32>} : memref<512x128xbf16, #tpu.memory_space<vmem>>, vector<512x128xbf16>,
    return
  }
  func.func @transform_0(%arg0: i32, %arg1: i32) -> (i32, i32) {
    %c0_i32 = arith.constant 0 : i32
    %c0_i32_0 = arith.constant 0 : i32
    return %arg0, %c0_i32 : i32, i32
  }
  func.func @transform_1(%arg0: i32, %arg1: i32) -> (i32, i32) {
    %c0_i32 = arith.constant 0 : i32
    %c0_i32_0 = arith.constant 0 : i32
    return %c0_i32, %arg1 : i32, i32
  }
  func.func @transform_2(%arg0: i32, %arg1: i32) -> (i32, i32) {
    %c0_i32 = arith.constant 0 : i32
    %c0_i32_0 = arith.constant 0 : i32
    return %c0_i32, %arg1 : i32, i32
  }
  func.func @transform_3(%arg0: i32, %arg1: i32) -> (i32, i32) {
    %c0_i32 = arith.constant 0 : i32
    return %arg0, %arg1 : i32, i32
  }
}

</mosaic_0001>

<llo_original>
// kernel: tpu_custom_call.1
$region0: #{tpu_custom_call.1}
  #allocation0 [shape = 'u32[]', space=smem, size = 0x4, offset = 0x4, fixed_abs, tag = 'smem constant byte address 0x4 - core index']
  #allocation1 [shape = 'u32[144,128]{1,0:T(1,128)}', space=vmem, size = 0x12000, scoped, tag = 'internal scratch']
  %s0 = inlined_call_operand.hbm [shape: bf16[512,128], index: 0, kind: input, shape index: {}]
  %s1 = inlined_call_operand.hbm [shape: bf16[128,128], index: 1, kind: input, shape index: {}]
  %s2 = inlined_call_operand.hbm [shape: f32[1,128], index: 2, kind: input, shape index: {}]
  %s3 = inlined_call_operand.hbm [shape: bf16[512,128], index: 3, kind: output, shape index: {}]
  %s4 = sld [smem:[#allocation0]]
  $region34: #{tpu_custom_call.1} parent=0
    _
  %s6 = ssub.s32 1, %s4
  %s7 = scalar_select 0, %s6, %s4
  $region1: #{tpu_custom_call.1} parent=0
    #allocation2 [shape = 'u8[131072]{0}', space=vmem, size = 0x20000, scoped, tag = 'input window, operand 0, single buffered']
    #allocation3 [shape = 's32[1]{0}', space=sflag, size = 0x4, scoped, tag = 'scoped memory for tpu_custom_call.1']
    #allocation4 [shape = 's32[1]{0}', space=sflag, size = 0x4, scoped, tag = 'scoped memory for tpu_custom_call.1']
    #allocation5 [shape = 'u8[32768]{0}', space=vmem, size = 0x8000, scoped, tag = 'input window, operand 1, single buffered']
    #allocation6 [shape = 's32[1]{0}', space=sflag, size = 0x4, scoped, tag = 'scoped memory for tpu_custom_call.1']
    #allocation7 [shape = 'u8[512]{0}', space=vmem, size = 0x400, scoped, tag = 'input window, operand 2, single buffered']
    #allocation8 [shape = 'u8[131072]{0}', space=vmem, size = 0x20000, scoped, tag = 'output window, operand 0, single buffered']
    %8 = vsyncpa [#allocation3], 0
    %9 = vsyncpa [#allocation6], 0
    %10 = vsyncpa [#allocation4], 0
    // Predicated region
    $region2: #{tpu_custom_call.1} parent=1 // pred_check
      _
    $region3: #{tpu_custom_call.1} parent=1 // pred_check_branch
      %12 = sbr.rel (0) target = $region5
    $region4: #{tpu_custom_call.1} parent=1 // pred_region
      %s14 = ssub.s32 4096, 4096
      %15 = vsyncadd [#allocation3], %s14
      %s16 = sshll.u32 [#allocation2], 4
      %s17 = int_to_ptr.vmem [resolvable:$true] %s16
      %22 = dma.hbm_to_vmem [thread:$0]  %s0, 4096, %s17, [#allocation3], 64, 64, 4
    $region5: #{tpu_custom_call.1} parent=1 // pred_fallthru
      _
    // Predicated region
    $region6: #{tpu_custom_call.1} parent=1 // pred_check
      _
    $region7: #{tpu_custom_call.1} parent=1 // pred_check_branch
      %24 = sbr.rel (0) target = $region9
    $region8: #{tpu_custom_call.1} parent=1 // pred_region
      %s26 = ssub.s32 1024, 1024
      %27 = vsyncadd [#allocation6], %s26
      %s28 = sshll.u32 [#allocation5], 4
      %s29 = int_to_ptr.vmem [resolvable:$true] %s28
      %34 = dma.hbm_to_vmem [thread:$0]  %s1, 1024, %s29, [#allocation6], 64, 64, 4
    $region9: #{tpu_custom_call.1} parent=1 // pred_fallthru
      _
    // Predicated region
    $region10: #{tpu_custom_call.1} parent=1 // pred_check
      _
    $region11: #{tpu_custom_call.1} parent=1 // pred_check_branch
      %36 = sbr.rel (0) target = $region13
    $region12: #{tpu_custom_call.1} parent=1 // pred_region
      %s38 = ssub.s32 16, 16
      %39 = vsyncadd [#allocation6], %s38
      %s41 = sshll.u32 [#allocation7], 4
      %s42 = int_to_ptr.vmem [resolvable:$true] %s41
      %44 = dma.hbm_to_vmem [thread:$0]  %s2, 16, %s42, [#allocation6]
    $region13: #{tpu_custom_call.1} parent=1 // pred_fallthru
      _
    // Predicated region
    $region14: #{tpu_custom_call.1} parent=1 // pred_check
      _
    $region15: #{tpu_custom_call.1} parent=1 // pred_check_branch
      %46 = sbr.rel (0) target = $region17
    $region16: #{tpu_custom_call.1} parent=1 // pred_region
      %47 = dma.done [#allocation3], 4096
    $region17: #{tpu_custom_call.1} parent=1 // pred_fallthru
      _
    // Predicated region
    $region18: #{tpu_custom_call.1} parent=1 // pred_check
      _
    $region19: #{tpu_custom_call.1} parent=1 // pred_check_branch
      %49 = sbr.rel (0) target = $region21
    $region20: #{tpu_custom_call.1} parent=1 // pred_region
      %50 = dma.done [#allocation6], 1024
    $region21: #{tpu_custom_call.1} parent=1 // pred_fallthru
      _
    // Predicated region
    $region22: #{tpu_custom_call.1} parent=1 // pred_check
      _
    $region23: #{tpu_custom_call.1} parent=1 // pred_check_branch
      %52 = sbr.rel (0) target = $region25
    $region24: #{tpu_custom_call.1} parent=1 // pred_region
      %53 = dma.done [#allocation6], 16
    $region25: #{tpu_custom_call.1} parent=1 // pred_fallthru
      _
    %v55 = vld [vmem:[#allocation2] sm:$0xf]
    %v56 = vld [vmem:[#allocation2 + $0x4] sm:$0xf]
    %v57 = vld [vmem:[#allocation2 + $0x8] sm:$0xf]
    %v58 = vld [vmem:[#allocation2 + $0xc] sm:$0xf]
    %v59 = vld [vmem:[#allocation2 + $0x10] sm:$0xf]
    %v60 = vld [vmem:[#allocation2 + $0x14] sm:$0xf]
    %v61 = vld [vmem:[#allocation2 + $0x18] sm:$0xf]
    %v62 = vld [vmem:[#allocation2 + $0x1c] sm:$0xf]
    %v63 = vld [vmem:[#allocation2 + $0x20] sm:$0xf]
    %v64 = vld [vmem:[#allocation2 + $0x24] sm:$0xf]
    %v65 = vld [vmem:[#allocation2 + $0x28] sm:$0xf]
    %v66 = vld [vmem:[#allocation2 + $0x2c] sm:$0xf]
    %v67 = vld [vmem:[#allocation2 + $0x30] sm:$0xf]
    %v68 = vld [vmem:[#allocation2 + $0x34] sm:$0xf]
    %v69 = vld [vmem:[#allocation2 + $0x38] sm:$0xf]
    %v70 = vld [vmem:[#allocation2 + $0x3c] sm:$0xf]
    %v71 = vld [vmem:[#allocation2 + $0x40] sm:$0xf]
    %v72 = vld [vmem:[#allocation2 + $0x44] sm:$0xf]
    %v73 = vld [vmem:[#allocation2 + $0x48] sm:$0xf]
    %v74 = vld [vmem:[#allocation2 + $0x4c] sm:$0xf]
    %v75 = vld [vmem:[#allocation2 + $0x50] sm:$0xf]
    %v76 = vld [vmem:[#allocation2 + $0x54] sm:$0xf]
    %v77 = vld [vmem:[#allocation2 + $0x58] sm:$0xf]
    %v78 = vld [vmem:[#allocation2 + $0x5c] sm:$0xf]
    %v79 = vld [vmem:[#allocation2 + $0x60] sm:$0xf]
    %v80 = vld [vmem:[#allocation2 + $0x64] sm:$0xf]
    %v81 = vld [vmem:[#allocation2 + $0x68] sm:$0xf]
    %v82 = vld [vmem:[#allocation2 + $0x6c] sm:$0xf]
    %v83 = vld [vmem:[#allocation2 + $0x70] sm:$0xf]
    %v84 = vld [vmem:[#allocation2 + $0x74] sm:$0xf]
    %v85 = vld [vmem:[#allocation2 + $0x78] sm:$0xf]
    %v86 = vld [vmem:[#allocation2 + $0x7c] sm:$0xf]
    %v87 = vld [vmem:[#allocation2 + $0x80] sm:$0xf]
    %v88 = vld [vmem:[#allocation2 + $0x84] sm:$0xf]
    %v89 = vld [vmem:[#allocation2 + $0x88] sm:$0xf]
    %v90 = vld [vmem:[#allocation2 + $0x8c] sm:$0xf]
    %v91 = vld [vmem:[#allocation2 + $0x90] sm:$0xf]
    %v92 = vld [vmem:[#allocation2 + $0x94] sm:$0xf]
    %v93 = vld [vmem:[#allocation2 + $0x98] sm:$0xf]
    %v94 = vld [vmem:[#allocation2 + $0x9c] sm:$0xf]
    %v95 = vld [vmem:[#allocation2 + $0xa0] sm:$0xf]
    %v96 = vld [vmem:[#allocation2 + $0xa4] sm:$0xf]
    %v97 = vld [vmem:[#allocation2 + $0xa8] sm:$0xf]
    %v98 = vld [vmem:[#allocation2 + $0xac] sm:$0xf]
    %v99 = vld [vmem:[#allocation2 + $0xb0] sm:$0xf]
    %v100 = vld [vmem:[#allocation2 + $0xb4] sm:$0xf]
    %v101 = vld [vmem:[#allocation2 + $0xb8] sm:$0xf]
    %v102 = vld [vmem:[#allocation2 + $0xbc] sm:$0xf]
    %v103 = vld [vmem:[#allocation2 + $0xc0] sm:$0xf]
    %v104 = vld [vmem:[#allocation2 + $0xc4] sm:$0xf]
    %v105 = vld [vmem:[#allocation2 + $0xc8] sm:$0xf]
    %v106 = vld [vmem:[#allocation2 + $0xcc] sm:$0xf]
    %v107 = vld [vmem:[#allocation2 + $0xd0] sm:$0xf]
    %v108 = vld [vmem:[#allocation2 + $0xd4] sm:$0xf]
    %v109 = vld [vmem:[#allocation2 + $0xd8] sm:$0xf]
    %v110 = vld [vmem:[#allocation2 + $0xdc] sm:$0xf]
    %v111 = vld [vmem:[#allocation2 + $0xe0] sm:$0xf]
    %v112 = vld [vmem:[#allocation2 + $0xe4] sm:$0xf]
    %v113 = vld [vmem:[#allocation2 + $0xe8] sm:$0xf]
    %v114 = vld [vmem:[#allocation2 + $0xec] sm:$0xf]
    %v115 = vld [vmem:[#allocation2 + $0xf0] sm:$0xf]
    %v116 = vld [vmem:[#allocation2 + $0xf4] sm:$0xf]
    %v117 = vld [vmem:[#allocation2 + $0xf8] sm:$0xf]
    %v118 = vld [vmem:[#allocation2 + $0xfc] sm:$0xf]
    %v119 = vld [vmem:[#allocation5] sm:$0xf]
    %v120 = vld [vmem:[#allocation5 + $0x4] sm:$0xf]
    %v121 = vld [vmem:[#allocation5 + $0x8] sm:$0xf]
    %v122 = vld [vmem:[#allocation5 + $0xc] sm:$0xf]
    %v123 = vld [vmem:[#allocation5 + $0x10] sm:$0xf]
    %v124 = vld [vmem:[#allocation5 + $0x14] sm:$0xf]
    %v125 = vld [vmem:[#allocation5 + $0x18] sm:$0xf]
    %v126 = vld [vmem:[#allocation5 + $0x1c] sm:$0xf]
    %v127 = vld [vmem:[#allocation5 + $0x20] sm:$0xf]
    %v128 = vld [vmem:[#allocation5 + $0x24] sm:$0xf]
    %v129 = vld [vmem:[#allocation5 + $0x28] sm:$0xf]
    %v130 = vld [vmem:[#allocation5 + $0x2c] sm:$0xf]
    %v131 = vld [vmem:[#allocation5 + $0x30] sm:$0xf]
    %v132 = vld [vmem:[#allocation5 + $0x34] sm:$0xf]
    %v133 = vld [vmem:[#allocation5 + $0x38] sm:$0xf]
    %v134 = vld [vmem:[#allocation5 + $0x3c] sm:$0xf]
    %v135 = vld [vmem:[#allocation7] sm:$0x1]
    %v137 = vlaneseq
    %v138 = vshrl.u32 %v137, 7
    %v139 = vsub.s32 0, %v138
    %v140 = vrot.slane %v135, %v139
    %v206 = vunpack.c.l.b16 %v55
    %v207 = vunpack.c.l.b16 %v56
    %v208 = vunpack.c.l.b16 %v57
    %v209 = vunpack.c.l.b16 %v58
    %v210 = vunpack.c.l.b16 %v59
    %v211 = vunpack.c.l.b16 %v60
    %v212 = vunpack.c.l.b16 %v61
    %v213 = vunpack.c.l.b16 %v62
    %v214 = vunpack.c.l.b16 %v63
    %v215 = vunpack.c.l.b16 %v64
    %v216 = vunpack.c.l.b16 %v65
    %v217 = vunpack.c.l.b16 %v66
    %v218 = vunpack.c.l.b16 %v67
    %v219 = vunpack.c.l.b16 %v68
    %v220 = vunpack.c.l.b16 %v69
    %v221 = vunpack.c.l.b16 %v70
    %v222 = vunpack.c.l.b16 %v71
    %v223 = vunpack.c.l.b16 %v72
    %v224 = vunpack.c.l.b16 %v73
    %v225 = vunpack.c.l.b16 %v74
    %v226 = vunpack.c.l.b16 %v75
    %v227 = vunpack.c.l.b16 %v76
    %v228 = vunpack.c.l.b16 %v77
    %v229 = vunpack.c.l.b16 %v78
    %v230 = vunpack.c.l.b16 %v79
    %v231 = vunpack.c.l.b16 %v80
    %v232 = vunpack.c.l.b16 %v81
    %v233 = vunpack.c.l.b16 %v82
    %v234 = vunpack.c.l.b16 %v83
    %v235 = vunpack.c.l.b16 %v84
    %v236 = vunpack.c.l.b16 %v85
    %v237 = vunpack.c.l.b16 %v86
    %v238 = vunpack.c.l.b16 %v87
    %v239 = vunpack.c.l.b16 %v88
    %v240 = vunpack.c.l.b16 %v89
    %v241 = vunpack.c.l.b16 %v90
    %v242 = vunpack.c.l.b16 %v91
    %v243 = vunpack.c.l.b16 %v92
    %v244 = vunpack.c.l.b16 %v93
    %v245 = vunpack.c.l.b16 %v94
    %v246 = vunpack.c.l.b16 %v95
    %v247 = vunpack.c.l.b16 %v96
    %v248 = vunpack.c.l.b16 %v97
    %v249 = vunpack.c.l.b16 %v98
    %v250 = vunpack.c.l.b16 %v99
    %v251 = vunpack.c.l.b16 %v100
    %v252 = vunpack.c.l.b16 %v101
    %v253 = vunpack.c.l.b16 %v102
    %v254 = vunpack.c.l.b16 %v103
    %v255 = vunpack.c.l.b16 %v104
    %v256 = vunpack.c.l.b16 %v105
    %v257 = vunpack.c.l.b16 %v106
    %v258 = vunpack.c.l.b16 %v107
    %v259 = vunpack.c.l.b16 %v108
    %v260 = vunpack.c.l.b16 %v109
    %v261 = vunpack.c.l.b16 %v110
    %v262 = vunpack.c.l.b16 %v111
    %v263 = vunpack.c.l.b16 %v112
    %v264 = vunpack.c.l.b16 %v113
    %v265 = vunpack.c.l.b16 %v114
    %v266 = vunpack.c.l.b16 %v115
    %v267 = vunpack.c.l.b16 %v116
    %v268 = vunpack.c.l.b16 %v117
    %v269 = vunpack.c.l.b16 %v118
    %v270 = vpack.c.b16 %v207, %v206
    %v271 = vpack.c.b16 %v209, %v208
    %v272 = vpack.c.b16 %v211, %v210
    %v273 = vpack.c.b16 %v213, %v212
    %v274 = vpack.c.b16 %v215, %v214
    %v275 = vpack.c.b16 %v217, %v216
    %v276 = vpack.c.b16 %v219, %v218
    %v277 = vpack.c.b16 %v221, %v220
    %v278 = vpack.c.b16 %v223, %v222
    %v279 = vpack.c.b16 %v225, %v224
    %v280 = vpack.c.b16 %v227, %v226
    %v281 = vpack.c.b16 %v229, %v228
    %v282 = vpack.c.b16 %v231, %v230
    %v283 = vpack.c.b16 %v233, %v232
    %v284 = vpack.c.b16 %v235, %v234
    %v285 = vpack.c.b16 %v237, %v236
    %v286 = vpack.c.b16 %v239, %v238
    %v287 = vpack.c.b16 %v241, %v240
    %v288 = vpack.c.b16 %v243, %v242
    %v289 = vpack.c.b16 %v245, %v244
    %v290 = vpack.c.b16 %v247, %v246
    %v291 = vpack.c.b16 %v249, %v248
    %v292 = vpack.c.b16 %v251, %v250
    %v293 = vpack.c.b16 %v253, %v252
    %v294 = vpack.c.b16 %v255, %v254
    %v295 = vpack.c.b16 %v257, %v256
    %v296 = vpack.c.b16 %v259, %v258
    %v297 = vpack.c.b16 %v261, %v260
    %v298 = vpack.c.b16 %v263, %v262
    %v299 = vpack.c.b16 %v265, %v264
    %v300 = vpack.c.b16 %v267, %v266
    %v301 = vpack.c.b16 %v269, %v268
    %v350 = vunpack.c.l.b16 %v119
    %v351 = vunpack.c.l.b16 %v120
    %v352 = vunpack.c.l.b16 %v121
    %v353 = vunpack.c.l.b16 %v122
    %v354 = vunpack.c.l.b16 %v123
    %v355 = vunpack.c.l.b16 %v124
    %v356 = vunpack.c.l.b16 %v125
    %v357 = vunpack.c.l.b16 %v126
    %v358 = vunpack.c.l.b16 %v127
    %v359 = vunpack.c.l.b16 %v128
    %v360 = vunpack.c.l.b16 %v129
    %v361 = vunpack.c.l.b16 %v130
    %v362 = vunpack.c.l.b16 %v131
    %v363 = vunpack.c.l.b16 %v132
    %v364 = vunpack.c.l.b16 %v133
    %v365 = vunpack.c.l.b16 %v134
    %v366 = vpack.c.b16 %v351, %v350
    %v367 = vpack.c.b16 %v353, %v352
    %v368 = vpack.c.b16 %v355, %v354
    %v369 = vpack.c.b16 %v357, %v356
    %v370 = vpack.c.b16 %v359, %v358
    %v371 = vpack.c.b16 %v361, %v360
    %v372 = vpack.c.b16 %v363, %v362
    %v373 = vpack.c.b16 %v365, %v364
    %382 = vmatprep.subr.bf16.mxu0 0
    %383 = vmatpush1.bf16.msra.mxu0 %v366
    %384 = vmatprep.subr.bf16.mxu0 0
    %385 = vmatpush1.bf16.msra.mxu0 %v367
    %386 = vmatprep.subr.bf16.mxu0 0
    %387 = vmatpush1.bf16.msra.mxu0 %v368
    %388 = vmatprep.subr.bf16.mxu0 0
    %389 = vmatpush1.bf16.msra.mxu0 %v369
    %390 = vmatprep.subr.bf16.mxu0 0
    %391 = vmatpush1.bf16.msra.mxu0 %v370
    %392 = vmatprep.subr.bf16.mxu0 0
    %393 = vmatpush1.bf16.msra.mxu0 %v371
    %394 = vmatprep.subr.bf16.mxu0 0
    %395 = vmatpush1.bf16.msra.mxu0 %v372
    %396 = vmatprep.subr.bf16.mxu0 0
    %397 = vmatpush1.bf16.msra.mxu0 %v373
    %398 = vmatprep.subr.bf16.mxu0 0
    %399 = vmatpush1.bf16.msra.mxu0 0
    %400 = vmatprep.subr.bf16.mxu0 0
    %401 = vmatpush1.bf16.msra.mxu0 0
    %402 = vmatprep.subr.bf16.mxu0 0
    %403 = vmatpush1.bf16.msra.mxu0 0
    %404 = vmatprep.subr.bf16.mxu0 0
    %405 = vmatpush1.bf16.msra.mxu0 0
    %406 = vmatprep.subr.bf16.mxu0 0
    %407 = vmatpush1.bf16.msra.mxu0 0
    %408 = vmatprep.subr.bf16.mxu0 0
    %409 = vmatpush1.bf16.msra.mxu0 0
    %410 = vmatprep.subr.bf16.mxu0 0
    %411 = vmatpush1.bf16.msra.mxu0 0
    %412 = vmatprep.subr.bf16.mxu0 0
    %413 = vmatpush1.bf16.msra.mxu0 0
    %414 = vmatprep.mubr.bf16.mxu0 0
    %415 = vmatmul.mubr.bf16.gmra.mrb[0].mxu0 %v270
    %v416 = vpop.f32.mrb[0].mxu0
    %v417 = vadd.f32 %v140, %v416
    %v418 = vpop.f32.mrb[0].mxu0
    %v419 = vpop.f32.mrb[0].mxu0
    %v420 = vadd.f32 %v140, %v419
    %v421 = vpop.f32.mrb[0].mxu0
    %422 = vmatprep.mubr.bf16.mxu0 0
    %423 = vmatmul.mubr.bf16.gmra.mrb[0].mxu0 %v271
    %v424 = vpop.f32.mrb[0].mxu0
    %v425 = vadd.f32 %v140, %v424
    %v426 = vpop.f32.mrb[0].mxu0
    %v427 = vpop.f32.mrb[0].mxu0
    %v428 = vadd.f32 %v140, %v427
    %v429 = vpop.f32.mrb[0].mxu0
    %430 = vmatprep.mubr.bf16.mxu0 0
    %431 = vmatmul.mubr.bf16.gmra.mrb[0].mxu0 %v272
    %v432 = vpop.f32.mrb[0].mxu0
    %v433 = vadd.f32 %v140, %v432
    %v434 = vpop.f32.mrb[0].mxu0
    %v435 = vpop.f32.mrb[0].mxu0
    %v436 = vadd.f32 %v140, %v435
    %v437 = vpop.f32.mrb[0].mxu0
    %438 = vmatprep.mubr.bf16.mxu0 0
    %439 = vmatmul.mubr.bf16.gmra.mrb[0].mxu0 %v273
    %v440 = vpop.f32.mrb[0].mxu0
    %v441 = vadd.f32 %v140, %v440
    %v442 = vpop.f32.mrb[0].mxu0
    %v443 = vpop.f32.mrb[0].mxu0
    %v444 = vadd.f32 %v140, %v443
    %v445 = vpop.f32.mrb[0].mxu0
    %446 = vmatprep.mubr.bf16.mxu0 0
    %447 = vmatmul.mubr.bf16.gmra.mrb[0].mxu0 %v274
    %v448 = vpop.f32.mrb[0].mxu0
    %v449 = vadd.f32 %v140, %v448
    %v450 = vpop.f32.mrb[0].mxu0
    %v451 = vpop.f32.mrb[0].mxu0
    %v452 = vadd.f32 %v140, %v451
    %v453 = vpop.f32.mrb[0].mxu0
    %454 = vmatprep.mubr.bf16.mxu0 0
    %455 = vmatmul.mubr.bf16.gmra.mrb[0].mxu0 %v275
    %v456 = vpop.f32.mrb[0].mxu0
    %v457 = vadd.f32 %v140, %v456
    %v458 = vpop.f32.mrb[0].mxu0
    %v459 = vpop.f32.mrb[0].mxu0
    %v460 = vadd.f32 %v140, %v459
    %v461 = vpop.f32.mrb[0].mxu0
    %462 = vmatprep.mubr.bf16.mxu0 0
    %463 = vmatmul.mubr.bf16.gmra.mrb[0].mxu0 %v276
    %v464 = vpop.f32.mrb[0].mxu0
    %v465 = vadd.f32 %v140, %v464
    %v466 = vpop.f32.mrb[0].mxu0
    %v467 = vpop.f32.mrb[0].mxu0
    %v468 = vadd.f32 %v140, %v467
    %v469 = vpop.f32.mrb[0].mxu0
    %470 = vmatprep.mubr.bf16.mxu0 0
    %471 = vmatmul.mubr.bf16.gmra.mrb[0].mxu0 %v277
    %v472 = vpop.f32.mrb[0].mxu0
    %v473 = vadd.f32 %v140, %v472
    %v474 = vpop.f32.mrb[0].mxu0
    %v475 = vpop.f32.mrb[0].mxu0
    %v476 = vadd.f32 %v140, %v475
    %v477 = vpop.f32.mrb[0].mxu0
    %478 = vmatprep.mubr.bf16.mxu0 0
    %479 = vmatmul.mubr.bf16.gmra.mrb[0].mxu0 %v278
    %v480 = vpop.f32.mrb[0].mxu0
    %v481 = vadd.f32 %v140, %v480
    %v482 = vpop.f32.mrb[0].mxu0
    %v483 = vpop.f32.mrb[0].mxu0
    %v484 = vadd.f32 %v140, %v483
    %v485 = vpop.f32.mrb[0].mxu0
    %486 = vmatprep.mubr.bf16.mxu0 0
    %487 = vmatmul.mubr.bf16.gmra.mrb[0].mxu0 %v279
    %v488 = vpop.f32.mrb[0].mxu0
    %v489 = vadd.f32 %v140, %v488
    %v490 = vpop.f32.mrb[0].mxu0
    %v491 = vpop.f32.mrb[0].mxu0
    %v492 = vadd.f32 %v140, %v491
    %v493 = vpop.f32.mrb[0].mxu0
    %494 = vmatprep.mubr.bf16.mxu0 0
    %495 = vmatmul.mubr.bf16.gmra.mrb[0].mxu0 %v280
    %v496 = vpop.f32.mrb[0].mxu0
    %v497 = vadd.f32 %v140, %v496
    %v498 = vpop.f32.mrb[0].mxu0
    %v499 = vpop.f32.mrb[0].mxu0
    %v500 = vadd.f32 %v140, %v499
    %v501 = vpop.f32.mrb[0].mxu0
    %502 = vmatprep.mubr.bf16.mxu0 0
    %503 = vmatmul.mubr.bf16.gmra.mrb[0].mxu0 %v281
    %v504 = vpop.f32.mrb[0].mxu0
    %v505 = vadd.f32 %v140, %v504
    %v506 = vpop.f32.mrb[0].mxu0
    %v507 = vpop.f32.mrb[0].mxu0
    %v508 = vadd.f32 %v140, %v507
    %v509 = vpop.f32.mrb[0].mxu0
    %510 = vmatprep.mubr.bf16.mxu0 0
    %511 = vmatmul.mubr.bf16.gmra.mrb[0].mxu0 %v282
    %v512 = vpop.f32.mrb[0].mxu0
    %v513 = vadd.f32 %v140, %v512
    %v514 = vpop.f32.mrb[0].mxu0
    %v515 = vpop.f32.mrb[0].mxu0
    %v516 = vadd.f32 %v140, %v515
    %v517 = vpop.f32.mrb[0].mxu0
    %518 = vmatprep.mubr.bf16.mxu0 0
    %519 = vmatmul.mubr.bf16.gmra.mrb[0].mxu0 %v283
    %v520 = vpop.f32.mrb[0].mxu0
    %v521 = vadd.f32 %v140, %v520
    %v522 = vpop.f32.mrb[0].mxu0
    %v523 = vpop.f32.mrb[0].mxu0
    %v524 = vadd.f32 %v140, %v523
    %v525 = vpop.f32.mrb[0].mxu0
    %526 = vmatprep.mubr.bf16.mxu0 0
    %527 = vmatmul.mubr.bf16.gmra.mrb[0].mxu0 %v284
    %v528 = vpop.f32.mrb[0].mxu0
    %v529 = vadd.f32 %v140, %v528
    %v530 = vpop.f32.mrb[0].mxu0
    %v531 = vpop.f32.mrb[0].mxu0
    %v532 = vadd.f32 %v140, %v531
    %v533 = vpop.f32.mrb[0].mxu0
    %534 = vmatprep.mubr.bf16.mxu0 0
    %535 = vmatmul.mubr.bf16.gmra.mrb[0].mxu0 %v285
    %v536 = vpop.f32.mrb[0].mxu0
    %v537 = vadd.f32 %v140, %v536
    %v538 = vpop.f32.mrb[0].mxu0
    %v539 = vpop.f32.mrb[0].mxu0
    %v540 = vadd.f32 %v140, %v539
    %v541 = vpop.f32.mrb[0].mxu0
    %542 = vmatprep.mubr.bf16.mxu0 0
    %543 = vmatmul.mubr.bf16.gmra.mrb[0].mxu0 %v286
    %v544 = vpop.f32.mrb[0].mxu0
    %v545 = vadd.f32 %v140, %v544
    %v546 = vpop.f32.mrb[0].mxu0
    %v547 = vpop.f32.mrb[0].mxu0
    %v548 = vadd.f32 %v140, %v547
    %v549 = vpop.f32.mrb[0].mxu0
    %550 = vmatprep.mubr.bf16.mxu0 0
    %551 = vmatmul.mubr.bf16.gmra.mrb[0].mxu0 %v287
    %v552 = vpop.f32.mrb[0].mxu0
    %v553 = vadd.f32 %v140, %v552
    %v554 = vpop.f32.mrb[0].mxu0
    %v555 = vpop.f32.mrb[0].mxu0
    %v556 = vadd.f32 %v140, %v555
    %v557 = vpop.f32.mrb[0].mxu0
    %558 = vmatprep.mubr.bf16.mxu0 0
    %559 = vmatmul.mubr.bf16.gmra.mrb[0].mxu0 %v288
    %v560 = vpop.f32.mrb[0].mxu0
    %v561 = vadd.f32 %v140, %v560
    %v562 = vpop.f32.mrb[0].mxu0
    %v563 = vpop.f32.mrb[0].mxu0
    %v564 = vadd.f32 %v140, %v563
    %v565 = vpop.f32.mrb[0].mxu0
    %566 = vmatprep.mubr.bf16.mxu0 0
    %567 = vmatmul.mubr.bf16.gmra.mrb[0].mxu0 %v289
    %v568 = vpop.f32.mrb[0].mxu0
    %v569 = vadd.f32 %v140, %v568
    %v570 = vpop.f32.mrb[0].mxu0
    %v571 = vpop.f32.mrb[0].mxu0
    %v572 = vadd.f32 %v140, %v571
    %v573 = vpop.f32.mrb[0].mxu0
    %574 = vmatprep.mubr.bf16.mxu0 0
    %575 = vmatmul.mubr.bf16.gmra.mrb[0].mxu0 %v290
    %v576 = vpop.f32.mrb[0].mxu0
    %v577 = vadd.f32 %v140, %v576
    %v578 = vpop.f32.mrb[0].mxu0
    %v579 = vpop.f32.mrb[0].mxu0
    %v580 = vadd.f32 %v140, %v579
    %v581 = vpop.f32.mrb[0].mxu0
    %582 = vmatprep.mubr.bf16.mxu0 0
    %583 = vmatmul.mubr.bf16.gmra.mrb[0].mxu0 %v291
    %v584 = vpop.f32.mrb[0].mxu0
    %v585 = vadd.f32 %v140, %v584
    %v586 = vpop.f32.mrb[0].mxu0
    %v587 = vpop.f32.mrb[0].mxu0
    %v588 = vadd.f32 %v140, %v587
    %v589 = vpop.f32.mrb[0].mxu0
    %590 = vmatprep.mubr.bf16.mxu0 0
    %591 = vmatmul.mubr.bf16.gmra.mrb[0].mxu0 %v292
    %v592 = vpop.f32.mrb[0].mxu0
    %v593 = vadd.f32 %v140, %v592
    %v594 = vpop.f32.mrb[0].mxu0
    %v595 = vpop.f32.mrb[0].mxu0
    %v596 = vadd.f32 %v140, %v595
    %v597 = vpop.f32.mrb[0].mxu0
    %598 = vmatprep.mubr.bf16.mxu0 0
    %599 = vmatmul.mubr.bf16.gmra.mrb[0].mxu0 %v293
    %v600 = vpop.f32.mrb[0].mxu0
    %v601 = vadd.f32 %v140, %v600
    %v602 = vpop.f32.mrb[0].mxu0
    %v603 = vpop.f32.mrb[0].mxu0
    %v604 = vadd.f32 %v140, %v603
    %v605 = vpop.f32.mrb[0].mxu0
    %606 = vmatprep.mubr.bf16.mxu0 0
    %607 = vmatmul.mubr.bf16.gmra.mrb[0].mxu0 %v294
    %v608 = vpop.f32.mrb[0].mxu0
    %v609 = vadd.f32 %v140, %v608
    %v610 = vpop.f32.mrb[0].mxu0
    %v611 = vpop.f32.mrb[0].mxu0
    %v612 = vadd.f32 %v140, %v611
    %v613 = vpop.f32.mrb[0].mxu0
    %614 = vmatprep.mubr.bf16.mxu0 0
    %615 = vmatmul.mubr.bf16.gmra.mrb[0].mxu0 %v295
    %v616 = vpop.f32.mrb[0].mxu0
    %v617 = vadd.f32 %v140, %v616
    %v618 = vpop.f32.mrb[0].mxu0
    %v619 = vpop.f32.mrb[0].mxu0
    %v620 = vadd.f32 %v140, %v619
    %v621 = vpop.f32.mrb[0].mxu0
    %622 = vmatprep.mubr.bf16.mxu0 0
    %623 = vmatmul.mubr.bf16.gmra.mrb[0].mxu0 %v296
    %v624 = vpop.f32.mrb[0].mxu0
    %v625 = vadd.f32 %v140, %v624
    %v626 = vpop.f32.mrb[0].mxu0
    %v627 = vpop.f32.mrb[0].mxu0
    %v628 = vadd.f32 %v140, %v627
    %v629 = vpop.f32.mrb[0].mxu0
    %630 = vmatprep.mubr.bf16.mxu0 0
    %631 = vmatmul.mubr.bf16.gmra.mrb[0].mxu0 %v297
    %v632 = vpop.f32.mrb[0].mxu0
    %v633 = vadd.f32 %v140, %v632
    %v634 = vpop.f32.mrb[0].mxu0
    %v635 = vpop.f32.mrb[0].mxu0
    %v636 = vadd.f32 %v140, %v635
    %v637 = vpop.f32.mrb[0].mxu0
    %638 = vmatprep.mubr.bf16.mxu0 0
    %639 = vmatmul.mubr.bf16.gmra.mrb[0].mxu0 %v298
    %v640 = vpop.f32.mrb[0].mxu0
    %v641 = vadd.f32 %v140, %v640
    %v642 = vpop.f32.mrb[0].mxu0
    %v643 = vpop.f32.mrb[0].mxu0
    %v644 = vadd.f32 %v140, %v643
    %v645 = vpop.f32.mrb[0].mxu0
    %646 = vmatprep.mubr.bf16.mxu0 0
    %647 = vmatmul.mubr.bf16.gmra.mrb[0].mxu0 %v299
    %v648 = vpop.f32.mrb[0].mxu0
    %v649 = vadd.f32 %v140, %v648
    %v650 = vpop.f32.mrb[0].mxu0
    %v651 = vpop.f32.mrb[0].mxu0
    %v652 = vadd.f32 %v140, %v651
    %v653 = vpop.f32.mrb[0].mxu0
    %654 = vmatprep.mubr.bf16.mxu0 0
    %655 = vmatmul.mubr.bf16.gmra.mrb[0].mxu0 %v300
    %v656 = vpop.f32.mrb[0].mxu0
    %v657 = vadd.f32 %v140, %v656
    %v658 = vpop.f32.mrb[0].mxu0
    %v659 = vpop.f32.mrb[0].mxu0
    %v660 = vadd.f32 %v140, %v659
    %v661 = vpop.f32.mrb[0].mxu0
    %662 = vmatprep.mubr.bf16.mxu0 0
    %663 = vmatmul.mubr.bf16.gmra.mrb[0].mxu0 %v301
    %v664 = vpop.f32.mrb[0].mxu0
    %v665 = vadd.f32 %v140, %v664
    %v666 = vpop.f32.mrb[0].mxu0
    %v667 = vpop.f32.mrb[0].mxu0
    %v668 = vadd.f32 %v140, %v667
    %v669 = vpop.f32.mrb[0].mxu0
    %670 = vdwg.mxu0
    %v671 = vmax.f32 %v417, 0.0
    %v672 = vmax.f32 %v420, 0.0
    %v673 = vmax.f32 %v425, 0.0
    %v674 = vmax.f32 %v428, 0.0
    %v675 = vmax.f32 %v433, 0.0
    %v676 = vmax.f32 %v436, 0.0
    %v677 = vmax.f32 %v441, 0.0
    %v678 = vmax.f32 %v444, 0.0
    %v679 = vmax.f32 %v449, 0.0
    %v680 = vmax.f32 %v452, 0.0
    %v681 = vmax.f32 %v457, 0.0
    %v682 = vmax.f32 %v460, 0.0
    %v683 = vmax.f32 %v465, 0.0
    %v684 = vmax.f32 %v468, 0.0
    %v685 = vmax.f32 %v473, 0.0
    %v686 = vmax.f32 %v476, 0.0
    %v687 = vmax.f32 %v481, 0.0
    %v688 = vmax.f32 %v484, 0.0
    %v689 = vmax.f32 %v489, 0.0
    %v690 = vmax.f32 %v492, 0.0
    %v691 = vmax.f32 %v497, 0.0
    %v692 = vmax.f32 %v500, 0.0
    %v693 = vmax.f32 %v505, 0.0
    %v694 = vmax.f32 %v508, 0.0
    %v695 = vmax.f32 %v513, 0.0
    %v696 = vmax.f32 %v516, 0.0
    %v697 = vmax.f32 %v521, 0.0
    %v698 = vmax.f32 %v524, 0.0
    %v699 = vmax.f32 %v529, 0.0
    %v700 = vmax.f32 %v532, 0.0
    %v701 = vmax.f32 %v537, 0.0
    %v702 = vmax.f32 %v540, 0.0
    %v703 = vmax.f32 %v545, 0.0
    %v704 = vmax.f32 %v548, 0.0
    %v705 = vmax.f32 %v553, 0.0
    %v706 = vmax.f32 %v556, 0.0
    %v707 = vmax.f32 %v561, 0.0
    %v708 = vmax.f32 %v564, 0.0
    %v709 = vmax.f32 %v569, 0.0
    %v710 = vmax.f32 %v572, 0.0
    %v711 = vmax.f32 %v577, 0.0
    %v712 = vmax.f32 %v580, 0.0
    %v713 = vmax.f32 %v585, 0.0
    %v714 = vmax.f32 %v588, 0.0
    %v715 = vmax.f32 %v593, 0.0
    %v716 = vmax.f32 %v596, 0.0
    %v717 = vmax.f32 %v601, 0.0
    %v718 = vmax.f32 %v604, 0.0
    %v719 = vmax.f32 %v609, 0.0
    %v720 = vmax.f32 %v612, 0.0
    %v721 = vmax.f32 %v617, 0.0
    %v722 = vmax.f32 %v620, 0.0
    %v723 = vmax.f32 %v625, 0.0
    %v724 = vmax.f32 %v628, 0.0
    %v725 = vmax.f32 %v633, 0.0
    %v726 = vmax.f32 %v636, 0.0
    %v727 = vmax.f32 %v641, 0.0
    %v728 = vmax.f32 %v644, 0.0
    %v729 = vmax.f32 %v649, 0.0
    %v730 = vmax.f32 %v652, 0.0
    %v731 = vmax.f32 %v657, 0.0
    %v732 = vmax.f32 %v660, 0.0
    %v733 = vmax.f32 %v665, 0.0
    %v734 = vmax.f32 %v668, 0.0
    %v735 = vpack.c.bf16 %v672, %v671
    %v736 = vpack.c.bf16 %v674, %v673
    %v737 = vpack.c.bf16 %v676, %v675
    %v738 = vpack.c.bf16 %v678, %v677
    %v739 = vpack.c.bf16 %v680, %v679
    %v740 = vpack.c.bf16 %v682, %v681
    %v741 = vpack.c.bf16 %v684, %v683
    %v742 = vpack.c.bf16 %v686, %v685
    %v743 = vpack.c.bf16 %v688, %v687
    %v744 = vpack.c.bf16 %v690, %v689
    %v745 = vpack.c.bf16 %v692, %v691
    %v746 = vpack.c.bf16 %v694, %v693
    %v747 = vpack.c.bf16 %v696, %v695
    %v748 = vpack.c.bf16 %v698, %v697
    %v749 = vpack.c.bf16 %v700, %v699
    %v750 = vpack.c.bf16 %v702, %v701
    %v751 = vpack.c.bf16 %v704, %v703
    %v752 = vpack.c.bf16 %v706, %v705
    %v753 = vpack.c.bf16 %v708, %v707
    %v754 = vpack.c.bf16 %v710, %v709
    %v755 = vpack.c.bf16 %v712, %v711
    %v756 = vpack.c.bf16 %v714, %v713
    %v757 = vpack.c.bf16 %v716, %v715
    %v758 = vpack.c.bf16 %v718, %v717
    %v759 = vpack.c.bf16 %v720, %v719
    %v760 = vpack.c.bf16 %v722, %v721
    %v761 = vpack.c.bf16 %v724, %v723
    %v762 = vpack.c.bf16 %v726, %v725
    %v763 = vpack.c.bf16 %v728, %v727
    %v764 = vpack.c.bf16 %v730, %v729
    %v765 = vpack.c.bf16 %v732, %v731
    %v766 = vpack.c.bf16 %v734, %v733
    %v799 = vunpack.c.l.b16 %v735
    %v800 = vunpack.c.h.b16 %v735
    %v801 = vunpack.c.l.b16 %v736
    %v802 = vunpack.c.h.b16 %v736
    %v803 = vunpack.c.l.b16 %v737
    %v804 = vunpack.c.h.b16 %v737
    %v805 = vunpack.c.l.b16 %v738
    %v806 = vunpack.c.h.b16 %v738
    %v807 = vunpack.c.l.b16 %v739
    %v808 = vunpack.c.h.b16 %v739
    %v809 = vunpack.c.l.b16 %v740
    %v810 = vunpack.c.h.b16 %v740
    %v811 = vunpack.c.l.b16 %v741
    %v812 = vunpack.c.h.b16 %v741
    %v813 = vunpack.c.l.b16 %v742
    %v814 = vunpack.c.h.b16 %v742
    %v815 = vunpack.c.l.b16 %v743
    %v816 = vunpack.c.h.b16 %v743
    %v817 = vunpack.c.l.b16 %v744
    %v818 = vunpack.c.h.b16 %v744
    %v819 = vunpack.c.l.b16 %v745
    %v820 = vunpack.c.h.b16 %v745
    %v821 = vunpack.c.l.b16 %v746
    %v822 = vunpack.c.h.b16 %v746
    %v823 = vunpack.c.l.b16 %v747
    %v824 = vunpack.c.h.b16 %v747
    %v825 = vunpack.c.l.b16 %v748
    %v826 = vunpack.c.h.b16 %v748
    %v827 = vunpack.c.l.b16 %v749
    %v828 = vunpack.c.h.b16 %v749
    %v829 = vunpack.c.l.b16 %v750
    %v830 = vunpack.c.h.b16 %v750
    %v831 = vunpack.c.l.b16 %v751
    %v832 = vunpack.c.h.b16 %v751
    %v833 = vunpack.c.l.b16 %v752
    %v834 = vunpack.c.h.b16 %v752
    %v835 = vunpack.c.l.b16 %v753
    %v836 = vunpack.c.h.b16 %v753
    %v837 = vunpack.c.l.b16 %v754
    %v838 = vunpack.c.h.b16 %v754
    %v839 = vunpack.c.l.b16 %v755
    %v840 = vunpack.c.h.b16 %v755
    %v841 = vunpack.c.l.b16 %v756
    %v842 = vunpack.c.h.b16 %v756
    %v843 = vunpack.c.l.b16 %v757
    %v844 = vunpack.c.h.b16 %v757
    %v845 = vunpack.c.l.b16 %v758
    %v846 = vunpack.c.h.b16 %v758
    %v847 = vunpack.c.l.b16 %v759
    %v848 = vunpack.c.h.b16 %v759
    %v849 = vunpack.c.l.b16 %v760
    %v850 = vunpack.c.h.b16 %v760
    %v851 = vunpack.c.l.b16 %v761
    %v852 = vunpack.c.h.b16 %v761
    %v853 = vunpack.c.l.b16 %v762
    %v854 = vunpack.c.h.b16 %v762
    %v855 = vunpack.c.l.b16 %v763
    %v856 = vunpack.c.h.b16 %v763
    %v857 = vunpack.c.l.b16 %v764
    %v858 = vunpack.c.h.b16 %v764
    %v859 = vunpack.c.l.b16 %v765
    %v860 = vunpack.c.h.b16 %v765
    %v861 = vunpack.c.l.b16 %v766
    %v862 = vunpack.c.h.b16 %v766
    %v863 = vpack.c.b16 %v799, %v799
    %v864 = vpack.c.b16 %v800, %v800
    %v865 = vpack.c.b16 %v801, %v801
    %v866 = vpack.c.b16 %v802, %v802
    %v867 = vpack.c.b16 %v803, %v803
    %v868 = vpack.c.b16 %v804, %v804
    %v869 = vpack.c.b16 %v805, %v805
    %v870 = vpack.c.b16 %v806, %v806
    %v871 = vpack.c.b16 %v807, %v807
    %v872 = vpack.c.b16 %v808, %v808
    %v873 = vpack.c.b16 %v809, %v809
    %v874 = vpack.c.b16 %v810, %v810
    %v875 = vpack.c.b16 %v811, %v811
    %v876 = vpack.c.b16 %v812, %v812
    %v877 = vpack.c.b16 %v813, %v813
    %v878 = vpack.c.b16 %v814, %v814
    %v879 = vpack.c.b16 %v815, %v815
    %v880 = vpack.c.b16 %v816, %v816
    %v881 = vpack.c.b16 %v817, %v817
    %v882 = vpack.c.b16 %v818, %v818
    %v883 = vpack.c.b16 %v819, %v819
    %v884 = vpack.c.b16 %v820, %v820
    %v885 = vpack.c.b16 %v821, %v821
    %v886 = vpack.c.b16 %v822, %v822
    %v887 = vpack.c.b16 %v823, %v823
    %v888 = vpack.c.b16 %v824, %v824
    %v889 = vpack.c.b16 %v825, %v825
    %v890 = vpack.c.b16 %v826, %v826
    %v891 = vpack.c.b16 %v827, %v827
    %v892 = vpack.c.b16 %v828, %v828
    %v893 = vpack.c.b16 %v829, %v829
    %v894 = vpack.c.b16 %v830, %v830
    %v895 = vpack.c.b16 %v831, %v831
    %v896 = vpack.c.b16 %v832, %v832
    %v897 = vpack.c.b16 %v833, %v833
    %v898 = vpack.c.b16 %v834, %v834
    %v899 = vpack.c.b16 %v835, %v835
    %v900 = vpack.c.b16 %v836, %v836
    %v901 = vpack.c.b16 %v837, %v837
    %v902 = vpack.c.b16 %v838, %v838
    %v903 = vpack.c.b16 %v839, %v839
    %v904 = vpack.c.b16 %v840, %v840
    %v905 = vpack.c.b16 %v841, %v841
    %v906 = vpack.c.b16 %v842, %v842
    %v907 = vpack.c.b16 %v843, %v843
    %v908 = vpack.c.b16 %v844, %v844
    %v909 = vpack.c.b16 %v845, %v845
    %v910 = vpack.c.b16 %v846, %v846
    %v911 = vpack.c.b16 %v847, %v847
    %v912 = vpack.c.b16 %v848, %v848
    %v913 = vpack.c.b16 %v849, %v849
    %v914 = vpack.c.b16 %v850, %v850
    %v915 = vpack.c.b16 %v851, %v851
    %v916 = vpack.c.b16 %v852, %v852
    %v917 = vpack.c.b16 %v853, %v853
    %v918 = vpack.c.b16 %v854, %v854
    %v919 = vpack.c.b16 %v855, %v855
    %v920 = vpack.c.b16 %v856, %v856
    %v921 = vpack.c.b16 %v857, %v857
    %v922 = vpack.c.b16 %v858, %v858
    %v923 = vpack.c.b16 %v859, %v859
    %v924 = vpack.c.b16 %v860, %v860
    %v925 = vpack.c.b16 %v861, %v861
    %v926 = vpack.c.b16 %v862, %v862
    %991 = vst [vmem:[#allocation8] sm:$0xf] %v863
    %992 = vst [vmem:[#allocation8 + $0x4] sm:$0xf] %v864
    %993 = vst [vmem:[#allocation8 + $0x8] sm:$0xf] %v865
    %994 = vst [vmem:[#allocation8 + $0xc] sm:$0xf] %v866
    %995 = vst [vmem:[#allocation8 + $0x10] sm:$0xf] %v867
    %996 = vst [vmem:[#allocation8 + $0x14] sm:$0xf] %v868
    %997 = vst [vmem:[#allocation8 + $0x18] sm:$0xf] %v869
    %998 = vst [vmem:[#allocation8 + $0x1c] sm:$0xf] %v870
    %999 = vst [vmem:[#allocation8 + $0x20] sm:$0xf] %v871
    %1000 = vst [vmem:[#allocation8 + $0x24] sm:$0xf] %v872
    %1001 = vst [vmem:[#allocation8 + $0x28] sm:$0xf] %v873
    %1002 = vst [vmem:[#allocation8 + $0x2c] sm:$0xf] %v874
    %1003 = vst [vmem:[#allocation8 + $0x30] sm:$0xf] %v875
    %1004 = vst [vmem:[#allocation8 + $0x34] sm:$0xf] %v876
    %1005 = vst [vmem:[#allocation8 + $0x38] sm:$0xf] %v877
    %1006 = vst [vmem:[#allocation8 + $0x3c] sm:$0xf] %v878
    %1007 = vst [vmem:[#allocation8 + $0x40] sm:$0xf] %v879
    %1008 = vst [vmem:[#allocation8 + $0x44] sm:$0xf] %v880
    %1009 = vst [vmem:[#allocation8 + $0x48] sm:$0xf] %v881
    %1010 = vst [vmem:[#allocation8 + $0x4c] sm:$0xf] %v882
    %1011 = vst [vmem:[#allocation8 + $0x50] sm:$0xf] %v883
    %1012 = vst [vmem:[#allocation8 + $0x54] sm:$0xf] %v884
    %1013 = vst [vmem:[#allocation8 + $0x58] sm:$0xf] %v885
    %1014 = vst [vmem:[#allocation8 + $0x5c] sm:$0xf] %v886
    %1015 = vst [vmem:[#allocation8 + $0x60] sm:$0xf] %v887
    %1016 = vst [vmem:[#allocation8 + $0x64] sm:$0xf] %v888
    %1017 = vst [vmem:[#allocation8 + $0x68] sm:$0xf] %v889
    %1018 = vst [vmem:[#allocation8 + $0x6c] sm:$0xf] %v890
    %1019 = vst [vmem:[#allocation8 + $0x70] sm:$0xf] %v891
    %1020 = vst [vmem:[#allocation8 + $0x74] sm:$0xf] %v892
    %1021 = vst [vmem:[#allocation8 + $0x78] sm:$0xf] %v893
    %1022 = vst [vmem:[#allocation8 + $0x7c] sm:$0xf] %v894
    %1023 = vst [vmem:[#allocation8 + $0x80] sm:$0xf] %v895
    %1024 = vst [vmem:[#allocation8 + $0x84] sm:$0xf] %v896
    %1025 = vst [vmem:[#allocation8 + $0x88] sm:$0xf] %v897
    %1026 = vst [vmem:[#allocation8 + $0x8c] sm:$0xf] %v898
    %1027 = vst [vmem:[#allocation8 + $0x90] sm:$0xf] %v899
    %1028 = vst [vmem:[#allocation8 + $0x94] sm:$0xf] %v900
    %1029 = vst [vmem:[#allocation8 + $0x98] sm:$0xf] %v901
    %1030 = vst [vmem:[#allocation8 + $0x9c] sm:$0xf] %v902
    %1031 = vst [vmem:[#allocation8 + $0xa0] sm:$0xf] %v903
    %1032 = vst [vmem:[#allocation8 + $0xa4] sm:$0xf] %v904
    %1033 = vst [vmem:[#allocation8 + $0xa8] sm:$0xf] %v905
    %1034 = vst [vmem:[#allocation8 + $0xac] sm:$0xf] %v906
    %1035 = vst [vmem:[#allocation8 + $0xb0] sm:$0xf] %v907
    %1036 = vst [vmem:[#allocation8 + $0xb4] sm:$0xf] %v908
    %1037 = vst [vmem:[#allocation8 + $0xb8] sm:$0xf] %v909
    %1038 = vst [vmem:[#allocation8 + $0xbc] sm:$0xf] %v910
    %1039 = vst [vmem:[#allocation8 + $0xc0] sm:$0xf] %v911
    %1040 = vst [vmem:[#allocation8 + $0xc4] sm:$0xf] %v912
    %1041 = vst [vmem:[#allocation8 + $0xc8] sm:$0xf] %v913
    %1042 = vst [vmem:[#allocation8 + $0xcc] sm:$0xf] %v914
    %1043 = vst [vmem:[#allocation8 + $0xd0] sm:$0xf] %v915
    %1044 = vst [vmem:[#allocation8 + $0xd4] sm:$0xf] %v916
    %1045 = vst [vmem:[#allocation8 + $0xd8] sm:$0xf] %v917
    %1046 = vst [vmem:[#allocation8 + $0xdc] sm:$0xf] %v918
    %1047 = vst [vmem:[#allocation8 + $0xe0] sm:$0xf] %v919
    %1048 = vst [vmem:[#allocation8 + $0xe4] sm:$0xf] %v920
    %1049 = vst [vmem:[#allocation8 + $0xe8] sm:$0xf] %v921
    %1050 = vst [vmem:[#allocation8 + $0xec] sm:$0xf] %v922
    %1051 = vst [vmem:[#allocation8 + $0xf0] sm:$0xf] %v923
    %1052 = vst [vmem:[#allocation8 + $0xf4] sm:$0xf] %v924
    %1053 = vst [vmem:[#allocation8 + $0xf8] sm:$0xf] %v925
    %1054 = vst [vmem:[#allocation8 + $0xfc] sm:$0xf] %v926
    // Predicated region
    $region26: #{tpu_custom_call.1} parent=1 // pred_check
      _
    $region27: #{tpu_custom_call.1} parent=1 // pred_check_branch
      %1056 = sbr.rel (0) target = $region29
    $region28: #{tpu_custom_call.1} parent=1 // pred_region
      %s1058 = ssub.s32 4096, 4096
      %1059 = vsyncadd [#allocation4], %s1058
      %s1060 = sshll.u32 [#allocation8], 4
      %s1061 = int_to_ptr.vmem [resolvable:$true] %s1060
      %1066 = dma.vmem_to_hbm [thread:$0]  %s1061, 4096, %s3, [#allocation4], 64, 64, 4
    $region29: #{tpu_custom_call.1} parent=1 // pred_fallthru
      _
    // Predicated region
    $region30: #{tpu_custom_call.1} parent=1 // pred_check
      _
    $region31: #{tpu_custom_call.1} parent=1 // pred_check_branch
      %1068 = sbr.rel (0) target = $region33
    $region32: #{tpu_custom_call.1} parent=1 // pred_region
      %1069 = dma.done [#allocation4], 4096
    $region33: #{tpu_custom_call.1} parent=1 // pred_fallthru
      _
    %1070 = vsyncpa [#allocation3], 1
    %1071 = vsyncpa [#allocation6], 1
    %1072 = vsyncpa [#allocation4], 1

</llo_original>
